<compile_context>
chip_gen: v7x
topology: tpu7x:2x2x1
jax: 0.10.0
libtpu: 0.0.40
codegen_flags: <defaults>
</compile_context>

<pallas_src>
import functools

import jax
import jax.numpy as jnp
from jax.experimental import pallas as pl
from jax.experimental.pallas import tpu as pltpu


# --------------------------------------------------------------------------
# GraphConv layer kernel:  out = [A_tile @ h_all, h_rows] @ [W_rel; W_root] + b
# --------------------------------------------------------------------------
def graphconv_kernel(a_ref, h_all_ref, h_row_ref, wcat_ref, b_ref, out_ref,
                     *, apply_relu):
    # a_ref:     (tm, N)      bf16  adjacency row tile (dst rows x all src cols)
    # h_all_ref: (N, Fin)     f32   full previous activations (VMEM-resident)
    # h_row_ref: (tm, Fin)    f32   this tile's own rows (root / self term)
    # wcat_ref:  (2*Fin, Fout) f32  fused weights [W_rel; W_root]
    # b_ref:     (1, Fout)    f32   lin_rel bias
    agg = jnp.dot(a_ref[...], h_all_ref[...].astype(jnp.bfloat16),
                  preferred_element_type=jnp.float32)                  # (tm, Fin)
    feat = jnp.concatenate([agg, h_row_ref[...]], axis=1)              # (tm, 2*Fin)
    h = (jnp.dot(feat, wcat_ref[...], preferred_element_type=jnp.float32)
         + b_ref[...])                                                 # (tm, Fout)
    if apply_relu:
        h = jnp.maximum(h, 0.0)
    out_ref[...] = h


def _vmem_limit_bytes(tm, n_pad, fin, fout):
    # double-buffered A tile (bf16) + resident h + row tile + weights + out tile
    need = (2 * tm * n_pad * 2
            + 2 * n_pad * fin * 4
            + 2 * tm * fin * 4
            + 2 * (2 * fin) * fout * 4
            + 2 * fout * 4
            + 2 * tm * fout * 4)
    # Raise above the default scoped limits (16 MiB v5e / 32 MiB v6e,v7x) but
    # stay under v7x's 64 MiB physical VMEM per TensorCore.
    return int(min(56 * 1024 * 1024, max(32 * 1024 * 1024, 2 * need)))


def graphconv_layer(adj_bf16, h, wcat, b, *, apply_relu, tm):
    n_pad = adj_bf16.shape[0]
    fin = h.shape[1]
    fout = wcat.shape[1]
    grid = (n_pad // tm,)

    flops = 2 * n_pad * n_pad * fin + 2 * n_pad * (2 * fin) * fout
    bytes_accessed = (n_pad * n_pad * 2            # A (bf16)
                      + 2 * n_pad * fin * 4        # h read (resident + row tiles)
                      + (2 * fin) * fout * 4       # weights
                      + n_pad * fout * 4)          # output

    return pl.pallas_call(
        functools.partial(graphconv_kernel, apply_relu=apply_relu),
        out_shape=jax.ShapeDtypeStruct((n_pad, fout), jnp.float32),
        grid=grid,
        in_specs=[
            pl.BlockSpec((tm, n_pad), lambda i: (i, 0)),       # A row tile (streamed)
            pl.BlockSpec((n_pad, fin), lambda i: (0, 0)),      # full h (resident)
            pl.BlockSpec((tm, fin), lambda i: (i, 0)),         # h rows for root term
            pl.BlockSpec((2 * fin, fout), lambda i: (0, 0)),   # fused [W_rel; W_root]
            pl.BlockSpec((1, fout), lambda i: (0, 0)),         # bias
        ],
        out_specs=pl.BlockSpec((tm, fout), lambda i: (i, 0)),
        compiler_params=pltpu.CompilerParams(
            dimension_semantics=("parallel",),   # row tiles split across v7x's 2 TCs
            vmem_limit_bytes=_vmem_limit_bytes(tm, n_pad, fin, fout),
        ),
        cost_estimate=pl.CostEstimate(flops=flops, transcendentals=0,
                                      bytes_accessed=bytes_accessed),
    )(adj_bf16, h, h, wcat, b)


# --------------------------------------------------------------------------
# global_mean_pool + dropout(eval)=identity + Linear
# --------------------------------------------------------------------------
def pool_linear_kernel(p_ref, h_ref, wlin_ref, blin_ref, out_ref):
    pooled = jnp.dot(p_ref[...], h_ref[...].astype(jnp.bfloat16),
                     preferred_element_type=jnp.float32)               # (G, H)
    # F.dropout(p=0.5, training=False) -> identity
    out_ref[...] = (jnp.dot(pooled, wlin_ref[...],
                            preferred_element_type=jnp.float32)
                    + blin_ref[...])                                   # (G, C)


def pool_linear(pool_bf16, h, wlin, blin):
    g = pool_bf16.shape[0]
    c = wlin.shape[1]
    vmem = pl.BlockSpec(memory_space=pltpu.MemorySpace.VMEM)
    return pl.pallas_call(
        pool_linear_kernel,
        out_shape=jax.ShapeDtypeStruct((g, c), jnp.float32),
        in_specs=[vmem] * 4,
        out_specs=vmem,
    )(pool_bf16, h, wlin, blin)


# --------------------------------------------------------------------------
# Full forward pass
# --------------------------------------------------------------------------
def gcn2e_forward(x, edge_index, edge_attr, batch, params, num_graphs,
                  *, tm_target=256):
    conv_params, (wlin, blin) = params
    n = x.shape[0]

    # Row-tile size + node-dim padding (zero-padded nodes have no edges and
    # zero pooling weight, so they never affect the output).
    if n <= tm_target:
        n_pad = ((n + 7) // 8) * 8
        tm = n_pad
    else:
        n_pad = ((n + tm_target - 1) // tm_target) * tm_target
        tm = tm_target

    src, dst = edge_index[0], edge_index[1]
    # A[dst, src] += edge_weight  (matches PyG GraphConv aggr='add' + edge_weight)
    adj = jnp.zeros((n_pad, n_pad), jnp.float32).at[dst, src].add(edge_attr)
    adj = adj.astype(jnp.bfloat16)

    # mean-pool matrix P[g, node] = 1/count_g if batch[node] == g
    one_hot = (batch[None, :] == jnp.arange(num_graphs)[:, None]).astype(jnp.float32)
    counts = jnp.maximum(one_hot.sum(axis=1, keepdims=True), 1.0)
    pool = jnp.pad(one_hot / counts, ((0, 0), (0, n_pad - n))).astype(jnp.bfloat16)

    h = jnp.pad(x.astype(jnp.float32), ((0, n_pad - n), (0, 0)))
    num_layers = len(conv_params)
    for li, (wcat, b) in enumerate(conv_params):
        # ReLU after conv1..conv5, none after conv6 (matches the torch forward).
        h = graphconv_layer(adj, h, wcat, b,
                            apply_relu=(li < num_layers - 1), tm=tm)

    return pool_linear(pool, h, wlin, blin)


# --------------------------------------------------------------------------
# Parameters (synthetic glorot init; fused [W_rel; W_root] per layer)
# --------------------------------------------------------------------------
def init_params(key, num_features, hidden, num_classes, num_layers=6):
    ks = jax.random.split(key, 2 * num_layers + 1)

    def glorot(k, fan_in, fan_out):
        lim = (6.0 / (fan_in + fan_out)) ** 0.5
        return jax.random.uniform(k, (fan_in, fan_out), jnp.float32, -lim, lim)

    conv_params = []
    fin = num_features
    for layer in range(num_layers):
        w_rel = glorot(ks[2 * layer], fin, hidden)
        w_root = glorot(ks[2 * layer + 1], fin, hidden)
        wcat = jnp.concatenate([w_rel, w_root], axis=0)   # (2*Fin, Fout)
        bias = jnp.zeros((1, hidden), jnp.float32)
        conv_params.append((wcat, bias))
        fin = hidden
    wlin = glorot(ks[-1], hidden, num_classes)
    blin = jnp.zeros((1, num_classes), jnp.float32)
    return conv_params, (wlin, blin)


if __name__ == "__main__":
    key = jax.random.PRNGKey(0)
    k_feat, k_edge, k_param = jax.random.split(key, 3)

    # Small synthetic batched graph: 2 graphs x 16 nodes = 32 nodes, 8 features.
    num_nodes_per_graph = 16
    num_graphs = 2
    num_nodes = num_nodes_per_graph * num_graphs
    num_features = 8
    hidden_channels = 32
    num_classes = 4

    x = jax.random.normal(k_feat, (num_nodes, num_features), jnp.float32)

    # ring edges (both directions) inside each graph
    srcs, dsts = [], []
    for g in range(num_graphs):
        base = g * num_nodes_per_graph
        for i in range(num_nodes_per_graph):
            a = base + i
            b = base + (i + 1) % num_nodes_per_graph
            srcs += [a, b]
            dsts += [b, a]
    edge_index = jnp.array([srcs, dsts], dtype=jnp.int32)      # [2, E]
    num_edges = edge_index.shape[1]
    edge_attr = jax.random.uniform(k_edge, (num_edges,), jnp.float32, 0.5, 1.5)
    batch = jnp.repeat(jnp.arange(num_graphs, dtype=jnp.int32), num_nodes_per_graph)

    params = init_params(k_param, num_features, hidden_channels, num_classes,
                         num_layers=6)

    out = gcn2e_forward(x, edge_index, edge_attr, batch, params, num_graphs)
    out = jax.block_until_ready(out)
    assert out.shape == (num_graphs, num_classes)
    print("KERNEL_OK")
</pallas_src>

<mosaic_0001>
module attributes {stable_mosaic.version = 11 : i64} {
  func.func @graphconv_kernel(%arg0: i32, %arg1: memref<32x32xbf16, #tpu.memory_space<vmem>>, %arg2: memref<32x8xf32, #tpu.memory_space<vmem>>, %arg3: memref<32x8xf32, #tpu.memory_space<vmem>>, %arg4: memref<16x32xf32, #tpu.memory_space<vmem>>, %arg5: memref<1x32xf32, #tpu.memory_space<vmem>>, %arg6: memref<32x32xf32, #tpu.memory_space<vmem>>) attributes {dimension_semantics = [#tpu.dimension_semantics<parallel>], iteration_bounds = array<i64: 1>, scalar_prefetch = 0 : i64, scratch_operands = 0 : i64, tpu.core_type = #tpu.core_type<tc>, window_params = [{transform_indices = @transform_0, window_bounds = array<i64: 32, 32>}, {pipeline_mode = #tpu.pipeline_mode<synchronous>, transform_indices = @transform_1, window_bounds = array<i64: 32, 8>}, {transform_indices = @transform_2, window_bounds = array<i64: 32, 8>}, {pipeline_mode = #tpu.pipeline_mode<synchronous>, transform_indices = @transform_3, window_bounds = array<i64: 16, 32>}, {pipeline_mode = #tpu.pipeline_mode<synchronous>, transform_indices = @transform_4, window_bounds = array<i64: 1, 32>}, {transform_indices = @transform_5, window_bounds = array<i64: 32, 32>}]} {
    %c0 = arith.constant 0 : index
    %c0_0 = arith.constant 0 : index
    %0 = vector.load %arg1[%c0, %c0_0] : memref<32x32xbf16, #tpu.memory_space<vmem>>, vector<32x32xbf16>
    %c0_1 = arith.constant 0 : index
    %c0_2 = arith.constant 0 : index
    %1 = vector.load %arg2[%c0_1, %c0_2] : memref<32x8xf32, #tpu.memory_space<vmem>>, vector<32x8xf32>
    %2 = arith.truncf %1 : vector<32x8xf32> to vector<32x8xbf16>
    %cst = arith.constant dense<0.000000e+00> : vector<32x8xf32>
    %3 = tpu.matmul %0, %2, %cst {dimension_numbers = #tpu.dot_dimension_numbers<[1], [0], [0], [1], [0, 0, 1, 1], [], []>} : vector<32x32xbf16>, vector<32x8xbf16>, vector<32x8xf32> -> vector<32x8xf32>
    %c0_3 = arith.constant 0 : index
    %c0_4 = arith.constant 0 : index
    %4 = vector.load %arg3[%c0_3, %c0_4] : memref<32x8xf32, #tpu.memory_space<vmem>>, vector<32x8xf32>
    %5 = tpu.concatenate %3, %4 in 1 : vector<32x8xf32>, vector<32x8xf32> -> vector<32x16xf32>
    %c0_5 = arith.constant 0 : index
    %c0_6 = arith.constant 0 : index
    %6 = vector.load %arg4[%c0_5, %c0_6] : memref<16x32xf32, #tpu.memory_space<vmem>>, vector<16x32xf32>
    %cst_7 = arith.constant dense<0.000000e+00> : vector<32x32xf32>
    %7 = tpu.matmul %5, %6, %cst_7 {dimension_numbers = #tpu.dot_dimension_numbers<[1], [0], [0], [1], [0, 0, 1, 1], [], []>} : vector<32x16xf32>, vector<16x32xf32>, vector<32x32xf32> -> vector<32x32xf32>
    %c0_8 = arith.constant 0 : index
    %c0_9 = arith.constant 0 : index
    %8 = vector.load %arg5[%c0_8, %c0_9] : memref<1x32xf32, #tpu.memory_space<vmem>>, vector<1x32xf32>
    %9 = vector.broadcast %8 : vector<1x32xf32> to vector<32x32xf32>
    %10 = arith.addf %7, %9 : vector<32x32xf32>
    %cst_10 = arith.constant 0.000000e+00 : f32
    %11 = vector.broadcast %cst_10 : f32 to vector<32x32xf32>
    %12 = arith.maximumf %10, %11 : vector<32x32xf32>
    %c0_11 = arith.constant 0 : index
    %c0_12 = arith.constant 0 : index
    %13 = vector.load %arg6[%c0_11, %c0_12] : memref<32x32xf32, #tpu.memory_space<vmem>>, vector<32x32xf32>
    tpu.vector_store %arg6[%c0_11, %c0_12], %12 {strides = array<i32>} : memref<32x32xf32, #tpu.memory_space<vmem>>, vector<32x32xf32>,
    return
  }
  func.func @transform_0(%arg0: i32) -> (i32, i32) {
    %c0_i32 = arith.constant 0 : i32
    %c0_i32_0 = arith.constant 0 : i32
    return %arg0, %c0_i32 : i32, i32
  }
  func.func @transform_1(%arg0: i32) -> (i32, i32) {
    %c0_i32 = arith.constant 0 : i32
    %c0_i32_0 = arith.constant 0 : i32
    %c0_i32_1 = arith.constant 0 : i32
    return %c0_i32, %c0_i32_0 : i32, i32
  }
  func.func @transform_2(%arg0: i32) -> (i32, i32) {
    %c0_i32 = arith.constant 0 : i32
    %c0_i32_0 = arith.constant 0 : i32
    return %arg0, %c0_i32 : i32, i32
  }
  func.func @transform_3(%arg0: i32) -> (i32, i32) {
    %c0_i32 = arith.constant 0 : i32
    %c0_i32_0 = arith.constant 0 : i32
    %c0_i32_1 = arith.constant 0 : i32
    return %c0_i32, %c0_i32_0 : i32, i32
  }
  func.func @transform_4(%arg0: i32) -> (i32, i32) {
    %c0_i32 = arith.constant 0 : i32
    %c0_i32_0 = arith.constant 0 : i32
    %c0_i32_1 = arith.constant 0 : i32
    return %c0_i32, %c0_i32_0 : i32, i32
  }
  func.func @transform_5(%arg0: i32) -> (i32, i32) {
    %c0_i32 = arith.constant 0 : i32
    %c0_i32_0 = arith.constant 0 : i32
    return %arg0, %c0_i32 : i32, i32
  }
}

</mosaic_0001>

<llo_original>
// kernel: tpu_custom_call.1
$region0: #{tpu_custom_call.1}
  #allocation0 [shape = 'u32[]', space=smem, size = 0x4, offset = 0x4, fixed_abs, tag = 'smem constant byte address 0x4 - core index']
  #allocation1 [shape = 'u32[144,128]{1,0:T(1,128)}', space=vmem, size = 0x12000, scoped, tag = 'internal scratch']
  %s0 = inlined_call_operand.vmem [shape: bf16[32,32], index: 0, kind: input, shape index: {}]
  %s1 = inlined_call_operand.vmem [shape: f32[32,8], index: 1, kind: input, shape index: {}]
  %s2 = inlined_call_operand.vmem [shape: f32[32,8], index: 2, kind: input, shape index: {}]
  %s3 = inlined_call_operand.vmem [shape: f32[16,32], index: 3, kind: input, shape index: {}]
  %s4 = inlined_call_operand.vmem [shape: f32[1,32], index: 4, kind: input, shape index: {}]
  %s5 = inlined_call_operand.hbm [shape: f32[32,32], index: 5, kind: output, shape index: {}]
  %s6 = sld [smem:[#allocation0]]
  $region30: #{tpu_custom_call.1} parent=0
    _
  %s8 = ssub.s32 1, %s6
  %s9 = scalar_select 0, %s8, %s6
  $region1: #{tpu_custom_call.1} parent=0
    #allocation2 [shape = 'u8[16384]{0}', space=vmem, size = 0x4000, scoped, tag = 'output window, operand 0, single buffered']
    #allocation3 [shape = 's32[1]{0}', space=sflag, size = 0x4, scoped, tag = 'scoped memory for tpu_custom_call.1']
    %10 = vsyncpa [#allocation3], 0
    // Predicated region
    $region2: #{tpu_custom_call.1} parent=1 // pred_check
      _
    $region3: #{tpu_custom_call.1} parent=1 // pred_check_branch
      %12 = sbr.rel (0) target = $region5
    $region4: #{tpu_custom_call.1} parent=1 // pred_region
      _
    $region5: #{tpu_custom_call.1} parent=1 // pred_fallthru
      _
    // Predicated region
    $region6: #{tpu_custom_call.1} parent=1 // pred_check
      _
    $region7: #{tpu_custom_call.1} parent=1 // pred_check_branch
      %14 = sbr.rel (0) target = $region9
    $region8: #{tpu_custom_call.1} parent=1 // pred_region
      _
    $region9: #{tpu_custom_call.1} parent=1 // pred_fallthru
      _
    // Predicated region
    $region10: #{tpu_custom_call.1} parent=1 // pred_check
      _
    $region11: #{tpu_custom_call.1} parent=1 // pred_check_branch
      %16 = sbr.rel (0) target = $region13
    $region12: #{tpu_custom_call.1} parent=1 // pred_region
      _
    $region13: #{tpu_custom_call.1} parent=1 // pred_fallthru
      _
    // Predicated region
    $region14: #{tpu_custom_call.1} parent=1 // pred_check
      _
    $region15: #{tpu_custom_call.1} parent=1 // pred_check_branch
      %18 = sbr.rel (0) target = $region17
    $region16: #{tpu_custom_call.1} parent=1 // pred_region
      _
    $region17: #{tpu_custom_call.1} parent=1 // pred_fallthru
      _
    // Predicated region
    $region18: #{tpu_custom_call.1} parent=1 // pred_check
      _
    $region19: #{tpu_custom_call.1} parent=1 // pred_check_branch
      %20 = sbr.rel (0) target = $region21
    $region20: #{tpu_custom_call.1} parent=1 // pred_region
      _
    $region21: #{tpu_custom_call.1} parent=1 // pred_fallthru
      _
    %v22 = vld [vmem:[%s0] sm:$0xf]
    %v23 = vld [vmem:[%s0 + $0x4] sm:$0xf]
    %v24 = vld [vmem:[%s0 + $0x8] sm:$0xf]
    %v25 = vld [vmem:[%s0 + $0xc] sm:$0xf]
    %v26 = vld [vmem:[%s1] sm:$0xff]
    %v27 = vld [vmem:[%s1 + $0x8] sm:$0xff]
    %v28 = vld [vmem:[%s1 + $0x10] sm:$0xff]
    %v29 = vld [vmem:[%s1 + $0x18] sm:$0xff]
    %v30 = vpack.c.bf16 %v27, %v26
    %v31 = vpack.c.bf16 %v29, %v28
    %v36 = vunpack.c.l.b16 %v22
    %v37 = vunpack.c.l.b16 %v23
    %v38 = vunpack.c.l.b16 %v24
    %v39 = vunpack.c.l.b16 %v25
    %v40 = vpack.c.b16 %v37, %v36
    %v41 = vpack.c.b16 %v39, %v38
    %vm42 = vcmask 261120
    %v44 = vsel %vm42, %v40, 0
    %v47 = vsel %vm42, %v41, 0
    %49 = vmatprep.subr.bf16.mxu0 0
    %50 = vmatpush1.bf16.msra.mxu0 %v30
    %51 = vmatprep.subr.bf16.mxu0 0
    %52 = vmatpush1.bf16.msra.mxu0 %v31
    %53 = vmatprep.subr.bf16.mxu0 0
    %54 = vmatpush1.bf16.msra.mxu0 0
    %55 = vmatprep.subr.bf16.mxu0 0
    %56 = vmatpush1.bf16.msra.mxu0 0
    %57 = vmatprep.subr.bf16.mxu0 0
    %58 = vmatpush1.bf16.msra.mxu0 0
    %59 = vmatprep.subr.bf16.mxu0 0
    %60 = vmatpush1.bf16.msra.mxu0 0
    %61 = vmatprep.subr.bf16.mxu0 0
    %62 = vmatpush1.bf16.msra.mxu0 0
    %63 = vmatprep.subr.bf16.mxu0 0
    %64 = vmatpush1.bf16.msra.mxu0 0
    %65 = vmatprep.subr.bf16.mxu0 0
    %66 = vmatpush1.bf16.msra.mxu0 0
    %67 = vmatprep.subr.bf16.mxu0 0
    %68 = vmatpush1.bf16.msra.mxu0 0
    %69 = vmatprep.subr.bf16.mxu0 0
    %70 = vmatpush1.bf16.msra.mxu0 0
    %71 = vmatprep.subr.bf16.mxu0 0
    %72 = vmatpush1.bf16.msra.mxu0 0
    %73 = vmatprep.subr.bf16.mxu0 0
    %74 = vmatpush1.bf16.msra.mxu0 0
    %75 = vmatprep.subr.bf16.mxu0 0
    %76 = vmatpush1.bf16.msra.mxu0 0
    %77 = vmatprep.subr.bf16.mxu0 0
    %78 = vmatpush1.bf16.msra.mxu0 0
    %79 = vmatprep.subr.bf16.mxu0 0
    %80 = vmatpush1.bf16.msra.mxu0 0
    %81 = vmatprep.mubr.bf16.mxu0 0
    %82 = vmatmul.mubr.bf16.gmra.mrb[0].mxu0 %v44
    %v83 = vpop.f32.mrb[0].mxu0
    %v84 = vadd.f32 0.0, %v83
    %v85 = vpop.f32.mrb[0].mxu0
    %v86 = vpop.f32.mrb[0].mxu0
    %v87 = vadd.f32 0.0, %v86
    %v88 = vpop.f32.mrb[0].mxu0
    %89 = vmatprep.mubr.bf16.mxu0 0
    %90 = vmatmul.mubr.bf16.gmra.mrb[0].mxu0 %v47
    %v91 = vpop.f32.mrb[0].mxu0
    %v92 = vadd.f32 0.0, %v91
    %v93 = vpop.f32.mrb[0].mxu0
    %v94 = vpop.f32.mrb[0].mxu0
    %v95 = vadd.f32 0.0, %v94
    %v96 = vpop.f32.mrb[0].mxu0
    %97 = vdwg.mxu0
    %v98 = vld [vmem:[%s2] sm:$0xff]
    %v99 = vld [vmem:[%s2 + $0x8] sm:$0xff]
    %v100 = vld [vmem:[%s2 + $0x10] sm:$0xff]
    %v101 = vld [vmem:[%s2 + $0x18] sm:$0xff]
    %106 = vrot.lane.b32.xlu0 %v98, 8
    %v107 = vpop.permute.xlu0 %106
    %108 = vrot.lane.b32.xlu0 %v99, 8
    %v109 = vpop.permute.xlu0 %108
    %110 = vrot.lane.b32.xlu0 %v100, 8
    %v111 = vpop.permute.xlu0 %110
    %112 = vrot.lane.b32.xlu0 %v101, 8
    %v113 = vpop.permute.xlu0 %112
    %vm118 = vcmask 64512
    %v119 = vsel %vm118, %v84, %v107
    %v120 = vsel %vm118, %v87, %v109
    %v121 = vsel %vm118, %v92, %v111
    %v122 = vsel %vm118, %v95, %v113
    %v123 = vld [vmem:[%s3] sm:$0xff]
    %v124 = vld [vmem:[%s3 + $0x8] sm:$0xff]
    %v125 = vld [vmem:[%s4] sm:$0x1]
    %v127 = vlaneseq
    %v128 = vshrl.u32 %v127, 7
    %v129 = vsub.s32 0, %v128
    %v130 = vrot.slane %v125, %v129
    %vm132 = vcmask 130048
    %v134 = vsel %vm132, %v119, 0
    %v137 = vsel %vm132, %v120, 0
    %v140 = vsel %vm132, %v121, 0
    %v143 = vsel %vm132, %v122, 0
    %145 = vmatprep.subr.mxu0 0.0
    %146 = vmatpush1.msra.mxu0 %v123
    %147 = vmatprep.subr.mxu0 0.0
    %148 = vmatpush1.msra.mxu0 %v124
    %149 = vmatprep.subr.mxu0 0.0
    %150 = vmatpush1.msra.mxu0 0.0
    %151 = vmatprep.subr.mxu0 0.0
    %152 = vmatpush1.msra.mxu0 0.0
    %153 = vmatprep.subr.mxu0 0.0
    %154 = vmatpush1.msra.mxu0 0.0
    %155 = vmatprep.subr.mxu0 0.0
    %156 = vmatpush1.msra.mxu0 0.0
    %157 = vmatprep.subr.mxu0 0.0
    %158 = vmatpush1.msra.mxu0 0.0
    %159 = vmatprep.subr.mxu0 0.0
    %160 = vmatpush1.msra.mxu0 0.0
    %161 = vmatprep.subr.mxu0 0.0
    %162 = vmatpush1.msra.mxu0 0.0
    %163 = vmatprep.subr.mxu0 0.0
    %164 = vmatpush1.msra.mxu0 0.0
    %165 = vmatprep.subr.mxu0 0.0
    %166 = vmatpush1.msra.mxu0 0.0
    %167 = vmatprep.subr.mxu0 0.0
    %168 = vmatpush1.msra.mxu0 0.0
    %169 = vmatprep.subr.mxu0 0.0
    %170 = vmatpush1.msra.mxu0 0.0
    %171 = vmatprep.subr.mxu0 0.0
    %172 = vmatpush1.msra.mxu0 0.0
    %173 = vmatprep.subr.mxu0 0.0
    %174 = vmatpush1.msra.mxu0 0.0
    %175 = vmatprep.subr.mxu0 0.0
    %176 = vmatpush1.msra.mxu0 0.0
    %177 = vmatprep.subr.mxu0 0.0
    %178 = vmatpush1.msra.mxu0 0.0
    %179 = vmatprep.subr.mxu0 0.0
    %180 = vmatpush1.msra.mxu0 0.0
    %181 = vmatprep.subr.mxu0 0.0
    %182 = vmatpush1.msra.mxu0 0.0
    %183 = vmatprep.subr.mxu0 0.0
    %184 = vmatpush1.msra.mxu0 0.0
    %185 = vmatprep.subr.mxu0 0.0
    %186 = vmatpush1.msra.mxu0 0.0
    %187 = vmatprep.subr.mxu0 0.0
    %188 = vmatpush1.msra.mxu0 0.0
    %189 = vmatprep.subr.mxu0 0.0
    %190 = vmatpush1.msra.mxu0 0.0
    %191 = vmatprep.subr.mxu0 0.0
    %192 = vmatpush1.msra.mxu0 0.0
    %193 = vmatprep.subr.mxu0 0.0
    %194 = vmatpush1.msra.mxu0 0.0
    %195 = vmatprep.subr.mxu0 0.0
    %196 = vmatpush1.msra.mxu0 0.0
    %197 = vmatprep.subr.mxu0 0.0
    %198 = vmatpush1.msra.mxu0 0.0
    %199 = vmatprep.subr.mxu0 0.0
    %200 = vmatpush1.msra.mxu0 0.0
    %201 = vmatprep.subr.mxu0 0.0
    %202 = vmatpush1.msra.mxu0 0.0
    %203 = vmatprep.subr.mxu0 0.0
    %204 = vmatpush1.msra.mxu0 0.0
    %205 = vmatprep.subr.mxu0 0.0
    %206 = vmatpush1.msra.mxu0 0.0
    %207 = vmatprep.subr.mxu0 0.0
    %208 = vmatpush1.msra.mxu0 0.0
    %209 = vmatprep.mubr.f32.mxu0 0.0
    %210 = vmatmul.mubr.f32.gmra.mrb[0].mxu0 %v134
    %v211 = vpop.f32.mrb[0].mxu0
    %v212 = vadd.f32 %v130, %v211
    %v213 = vpop.f32.mrb[0].mxu0
    %214 = vmatprep.mubr.f32.mxu0 0.0
    %215 = vmatmul.mubr.f32.gmra.mrb[0].mxu0 %v137
    %v216 = vpop.f32.mrb[0].mxu0
    %v217 = vadd.f32 %v130, %v216
    %v218 = vpop.f32.mrb[0].mxu0
    %219 = vmatprep.mubr.f32.mxu0 0.0
    %220 = vmatmul.mubr.f32.gmra.mrb[0].mxu0 %v140
    %v221 = vpop.f32.mrb[0].mxu0
    %v222 = vadd.f32 %v130, %v221
    %v223 = vpop.f32.mrb[0].mxu0
    %224 = vmatprep.mubr.f32.mxu0 0.0
    %225 = vmatmul.mubr.f32.gmra.mrb[0].mxu0 %v143
    %v226 = vpop.f32.mrb[0].mxu0
    %v227 = vadd.f32 %v130, %v226
    %v228 = vpop.f32.mrb[0].mxu0
    %229 = vdwg.mxu0
    %v230 = vmax.f32 %v212, 0.0
    %v231 = vmax.f32 %v217, 0.0
    %v232 = vmax.f32 %v222, 0.0
    %v233 = vmax.f32 %v227, 0.0
    %234 = vst.msk [vmem:[#allocation2] sm:$0xff] %vm42, %v230
    %235 = vst.msk [vmem:[#allocation2 + $0x8] sm:$0xff] %vm42, %v231
    %236 = vst.msk [vmem:[#allocation2 + $0x10] sm:$0xff] %vm42, %v232
    %237 = vst.msk [vmem:[#allocation2 + $0x18] sm:$0xff] %vm42, %v233
    // Predicated region
    $region22: #{tpu_custom_call.1} parent=1 // pred_check
      _
    $region23: #{tpu_custom_call.1} parent=1 // pred_check_branch
      %239 = sbr.rel (0) target = $region25
    $region24: #{tpu_custom_call.1} parent=1 // pred_region
      %s241 = ssub.s32 512, 512
      %242 = vsyncadd [#allocation3], %s241
      %s243 = sshll.u32 [#allocation2], 4
      %s244 = int_to_ptr.vmem [resolvable:$true] %s243
      %249 = dma.vmem_to_hbm [thread:$0]  %s244, 512, %s5, [#allocation3], 128, 128, 8
    $region25: #{tpu_custom_call.1} parent=1 // pred_fallthru
      _
    // Predicated region
    $region26: #{tpu_custom_call.1} parent=1 // pred_check
      _
    $region27: #{tpu_custom_call.1} parent=1 // pred_check_branch
      %251 = sbr.rel (0) target = $region29
    $region28: #{tpu_custom_call.1} parent=1 // pred_region
      %252 = dma.done [#allocation3], 512
    $region29: #{tpu_custom_call.1} parent=1 // pred_fallthru
      _
    %253 = vsyncpa [#allocation3], 1

</llo_original>
